<compile_context>
chip_gen: v7x
topology: tpu7x:2x2x1
jax: 0.10.0
libtpu: 0.0.40
codegen_flags: <defaults>
</compile_context>

<pallas_src>
import functools
import math

import jax
import jax.numpy as jnp
from jax.experimental import pallas as pl
from jax.experimental.pallas import tpu as pltpu


def _enhance_kernel(x_ref, ws_ref, we_ref, o_ref, *, C):
    """One (Rt, hw_bl) tile: two chained depthwise-over-C convolutions.

    Rows (sublanes) are the flattened (batch, channel) axis -- blocks always
    span whole batch elements, so row % C == channel.  Lanes are HW positions.
    The residual add of the original module is pre-folded into conv_e's center
    tap by the wrapper, so the kernel is just conv_s followed by conv_e.
    """
    x = x_ref[...].astype(jnp.float32)
    Rt, _ = x.shape
    Ks = ws_ref.shape[0]
    Ke = we_ref.shape[0]

    # Channel index of every sublane row (zero-padding masks at the C edges).
    c_idx = jax.lax.broadcasted_iota(jnp.int32, (Rt, 1), 0) % C
    offsets = {k - Ks // 2 for k in range(Ks)} | {k - Ke // 2 for k in range(Ke)}
    valid = {d: jnp.logical_and(c_idx + d >= 0, c_idx + d < C)
             for d in sorted(offsets) if d != 0}

    def dwconv(v, w_ref, K):
        half = K // 2
        acc = w_ref[half:half + 1, :] * v          # center tap (no shift)
        for k in range(K):                         # static, tiny (K=3) -> unrolled
            d = k - half
            if d == 0:
                continue
            # tap[r, :] = v[r + d, :] with zero padding at channel edges.
            # Sublane roll runs on the XLU; the mask kills wrap-around rows.
            tap = pltpu.roll(v, shift=(-d) % Rt, axis=0)
            tap = jnp.where(valid[d], tap, 0.0)
            acc = acc + w_ref[k:k + 1, :] * tap    # (1, hw_bl) broadcast over rows
        return acc

    y1 = dwconv(x, ws_ref, Ks)      # conv_s
    y2 = dwconv(y1, we_ref, Ke)     # conv_e (residual already folded into its weights)
    o_ref[...] = y2.astype(o_ref.dtype)


def _device_vmem_bytes():
    """Best-effort physical-VMEM query; conservative (v7x, 64 MiB) fallback."""
    try:
        info = pltpu.get_tpu_info()
        for attr in ("vmem_capacity_bytes", "vmem_bytes", "vmem_size_bytes"):
            v = getattr(info, attr, None)
            if v:
                return int(v)
    except Exception:
        pass
    return 64 << 20


def _choose_tiles(B, C, HW, itemsize, tile_budget, min_blocks=4):
    """Pick (Bt, hw_bl): lane-dense, budget-bounded, enough blocks for 2 TCs."""
    # Lane blocks: divisors of HW that are multiples of 128 (else full HW only).
    if HW % 128 == 0:
        lane_cands = sorted({d for d in range(128, HW + 1, 128) if HW % d == 0},
                            reverse=True)
    else:
        lane_cands = [HW]
    # Sublane blocks: whole batch elements; dtype-aware sublane alignment.
    align = max(8, 32 // itemsize)            # f32: 8, bf16: 16, int8: 32
    row_cands = [bt for bt in range(B, 0, -1)
                 if B % bt == 0 and ((bt * C) % align == 0 or bt == B)]

    dense_floor = min(512, HW)
    pairs = [(bt, hb) for bt in row_cands for hb in lane_cands]

    def tbytes(bt, hb):
        return bt * C * hb * itemsize

    fitting = [(bt, hb) for bt, hb in pairs if tbytes(bt, hb) <= tile_budget]
    if fitting:
        def score(p):
            bt, hb = p
            nblk = (B // bt) * (HW // hb)
            return (hb >= dense_floor,        # lane-dense DMAs first
                    nblk >= min_blocks,       # enough blocks to split over 2 TCs
                    tbytes(bt, hb),           # then the biggest tile
                    hb)
        return max(fitting, key=score)
    # Nothing fits the budget: smallest legal tile (C needs a halo to split,
    # HW block is already minimal).
    return min(pairs, key=lambda p: tbytes(*p))


def channel_enhance_4(x_nchw, w_s, w_e, res_lo, res_hi):
    """Forward of ChannelEnhance_4 (fusion_SE='A', residual insert, net=identity)."""
    B, C, H, W = x_nchw.shape
    HW = H * W
    Ks = w_s.shape[1]
    Ke = w_e.shape[1]
    itemsize = x_nchw.dtype.itemsize

    # Free (contiguous) reshape -- no transposes of the activation tensor.
    x2d = x_nchw.reshape(B * C, HW)

    # Tiny weight transposes; fold the residual add into conv_e's center tap:
    #   y2[:, lo:hi] += y1[:, lo:hi]   <=>   we[center, lo:hi] += 1
    ws_t = jnp.transpose(w_s).astype(jnp.float32)              # (Ks, HW)
    we_t = jnp.transpose(w_e).astype(jnp.float32)              # (Ke, HW)
    we_t = we_t.at[Ke // 2, res_lo:res_hi].add(1.0)

    # Generation-aware tile / VMEM budgets.
    phys_vmem = _device_vmem_bytes()
    tile_budget = (6 << 20) if phys_vmem > (64 << 20) else (4 << 20)
    Bt, hw_bl = _choose_tiles(B, C, HW, itemsize, tile_budget)
    Rt = Bt * C
    # Live set ~= 2x double-buffered input + 2x output + f32 y1/y2/tap temps.
    live_est = 8 * Rt * hw_bl * max(itemsize, 4)
    vmem_limit = min((phys_vmem * 7) // 8,
                     max((phys_vmem * 3) // 4, live_est + (4 << 20)))

    # Row axis is the inner (fastest) grid axis, so the weight block index
    # (0, h) is constant across it and Pallas DMAs the weights once per h.
    grid = (HW // hw_bl, (B * C) // Rt)

    kernel = functools.partial(_enhance_kernel, C=C)

    out2d = pl.pallas_call(
        kernel,
        out_shape=jax.ShapeDtypeStruct((B * C, HW), x_nchw.dtype),
        grid_spec=pltpu.PrefetchScalarGridSpec(
            num_scalar_prefetch=0,
            grid=grid,
            in_specs=[
                pl.BlockSpec((Rt, hw_bl), lambda h, r: (r, h)),
                pl.BlockSpec((Ks, hw_bl), lambda h, r: (0, h)),
                pl.BlockSpec((Ke, hw_bl), lambda h, r: (0, h)),
            ],
            out_specs=pl.BlockSpec((Rt, hw_bl), lambda h, r: (r, h)),
        ),
        compiler_params=pltpu.CompilerParams(
            dimension_semantics=("parallel", "parallel"),
            vmem_limit_bytes=int(vmem_limit)),
    )(x2d, ws_t, we_t)

    # Free reshape back to NCHW.
    return out2d.reshape(B, C, H, W)


def make_conv_weights(hw, n_div, block_position, kernelsize):
    """Deterministic re-implementation of init_conv / init_conv_for_others (strategy 3)."""
    fold = hw // n_div
    if block_position == "start":
        i = 0
    elif block_position == "middle":
        i = int(n_div // 2 - 1)
    elif block_position == "end":
        i = n_div - 2
    else:
        raise ValueError(block_position)
    middle = math.floor(kernelsize / 2)
    w = jnp.zeros((hw, kernelsize), jnp.float32)
    if i * fold != 0:
        w = w.at[: i * fold, middle].set(1.0)
    if (i + 2) * fold < hw:
        w = w.at[(i + 2) * fold:, middle].set(1.0)
    # init_strategy 3: shift pattern inside the enhanced block
    w = w.at[i * fold:(i + 1) * fold, middle + 1].set(1.0)
    w = w.at[(i + 1) * fold:(i + 2) * fold, middle - 1].set(1.0)
    return w, i, fold


def reference(x_nchw, w_s, w_e, res_lo, res_hi):
    """Plain-JAX reference for verification (mirrors the PyTorch forward)."""
    B, C, H, W = x_nchw.shape
    HW = H * W
    y = jnp.transpose(x_nchw.reshape(B, C, HW), (0, 2, 1))   # (B, HW, C)

    def dw(v, w):
        K = w.shape[1]
        half = K // 2
        vp = jnp.pad(v, ((0, 0), (0, 0), (half, half)))
        out = jnp.zeros_like(v)
        for k in range(K):
            out = out + w[None, :, k:k + 1] * vp[:, :, k:k + C]
        return out

    y1 = dw(y, w_s)
    y2 = dw(y1, w_e)
    rows = jnp.arange(HW)
    mask = ((rows >= res_lo) & (rows < res_hi)).astype(x_nchw.dtype)[None, :, None]
    out = y2 + mask * y1
    return jnp.transpose(out, (0, 2, 1)).reshape(B, C, H, W)


if __name__ == "__main__":
    # Small shapes consistent with the module (M=1 for non-GCN); HW = H*W is a
    # multiple of 128 so the kernel's lane axis is dense.
    B, C, H, W = 2, 16, 16, 16
    HW = H * W
    n_div_s, n_div_e = 8, 8
    kernelsize_e = 3

    key = jax.random.PRNGKey(0)
    x = jax.random.normal(key, (B, C, H, W), dtype=jnp.float32)

    # conv_s: block_position_s='start', default init_strategy=3, kernelsize=3
    w_s, i_s, fold_s = make_conv_weights(HW, n_div_s, "start", 3)
    # conv_e: block_position_e='middle', init_strategy_e=3, kernelsize_e
    w_e, i_e, fold_e = make_conv_weights(HW, n_div_e, "middle", kernelsize_e)
    res_lo, res_hi = i_e * fold_e, (i_e + 2) * fold_e

    out = channel_enhance_4(x, w_s, w_e, res_lo, res_hi)
    out = jax.block_until_ready(out)

    ref = reference(x, w_s, w_e, res_lo, res_hi)
    assert out.shape == (B, C, H, W)
    assert jnp.allclose(out, ref, atol=1e-5, rtol=1e-5), "mismatch vs reference"

    # TODO(synk): self.net (the wrapped downstream network) is treated as identity here.
    print("KERNEL_OK")
</pallas_src>

<mosaic_0001>
module attributes {stable_mosaic.version = 11 : i64} {
  func.func @_enhance_kernel(%arg0: i32, %arg1: i32, %arg2: memref<32x256xf32, #tpu.memory_space<vmem>>, %arg3: memref<3x256xf32, #tpu.memory_space<vmem>>, %arg4: memref<3x256xf32, #tpu.memory_space<vmem>>, %arg5: memref<32x256xf32, #tpu.memory_space<vmem>>) attributes {dimension_semantics = [#tpu.dimension_semantics<parallel>, #tpu.dimension_semantics<parallel>], iteration_bounds = array<i64: 1, 1>, scalar_prefetch = 0 : i64, scratch_operands = 0 : i64, tpu.core_type = #tpu.core_type<tc>, window_params = [{transform_indices = @transform_0, window_bounds = array<i64: 32, 256>}, {transform_indices = @transform_1, window_bounds = array<i64: 3, 256>}, {transform_indices = @transform_2, window_bounds = array<i64: 3, 256>}, {transform_indices = @transform_3, window_bounds = array<i64: 32, 256>}]} {
    %c0 = arith.constant 0 : index
    %c0_0 = arith.constant 0 : index
    %0 = vector.load %arg2[%c0, %c0_0] : memref<32x256xf32, #tpu.memory_space<vmem>>, vector<32x256xf32>
    %1 = tpu.iota {dimensions = array<i32: 0>} : vector<32x1xi32>
    %c16_i32 = arith.constant 16 : i32
    %c0_i32 = arith.constant 0 : i32
    %2 = arith.cmpi eq, %c16_i32, %c0_i32 : i32
    %c1_i32 = arith.constant 1 : i32
    %3 = arith.select %2, %c1_i32, %c16_i32 : i32
    %4 = vector.broadcast %3 : i32 to vector<32x1xi32>
    %5 = arith.remsi %1, %4 : vector<32x1xi32>
    %c0_i32_1 = arith.constant 0 : i32
    %6 = vector.broadcast %c0_i32_1 : i32 to vector<32x1xi32>
    %7 = arith.cmpi ne, %5, %6 : vector<32x1xi32>
    %c0_i32_2 = arith.constant 0 : i32
    %8 = vector.broadcast %c0_i32_2 : i32 to vector<32x1xi32>
    %9 = arith.cmpi slt, %5, %8 : vector<32x1xi32>
    %c0_i32_3 = arith.constant 0 : i32
    %10 = arith.cmpi slt, %3, %c0_i32_3 : i32
    %11 = vector.broadcast %10 : i1 to vector<32x1xi1>
    %12 = vector.broadcast %11 : vector<32x1xi1> to vector<32x1xi1>
    %13 = arith.xori %9, %12 : vector<32x1xi1>
    %14 = arith.andi %13, %7 : vector<32x1xi1>
    %15 = vector.broadcast %3 : i32 to vector<32x1xi32>
    %16 = arith.addi %5, %15 : vector<32x1xi32>
    %17 = arith.select %14, %16, %5 : vector<32x1xi1>, vector<32x1xi32>
    %c-1_i32 = arith.constant -1 : i32
    %18 = vector.broadcast %c-1_i32 : i32 to vector<32x1xi32>
    %19 = arith.addi %17, %18 : vector<32x1xi32>
    %c0_i32_4 = arith.constant 0 : i32
    %20 = vector.broadcast %c0_i32_4 : i32 to vector<32x1xi32>
    %21 = arith.cmpi sge, %19, %20 : vector<32x1xi32>
    %c-1_i32_5 = arith.constant -1 : i32
    %22 = vector.broadcast %c-1_i32_5 : i32 to vector<32x1xi32>
    %23 = arith.addi %17, %22 : vector<32x1xi32>
    %c16_i32_6 = arith.constant 16 : i32
    %24 = vector.broadcast %c16_i32_6 : i32 to vector<32x1xi32>
    %25 = arith.cmpi slt, %23, %24 : vector<32x1xi32>
    %26 = arith.andi %21, %25 : vector<32x1xi1>
    %c1_i32_7 = arith.constant 1 : i32
    %27 = vector.broadcast %c1_i32_7 : i32 to vector<32x1xi32>
    %28 = arith.addi %17, %27 : vector<32x1xi32>
    %c0_i32_8 = arith.constant 0 : i32
    %29 = vector.broadcast %c0_i32_8 : i32 to vector<32x1xi32>
    %30 = arith.cmpi sge, %28, %29 : vector<32x1xi32>
    %c1_i32_9 = arith.constant 1 : i32
    %31 = vector.broadcast %c1_i32_9 : i32 to vector<32x1xi32>
    %32 = arith.addi %17, %31 : vector<32x1xi32>
    %c16_i32_10 = arith.constant 16 : i32
    %33 = vector.broadcast %c16_i32_10 : i32 to vector<32x1xi32>
    %34 = arith.cmpi slt, %32, %33 : vector<32x1xi32>
    %35 = arith.andi %30, %34 : vector<32x1xi1>
    %c1 = arith.constant 1 : index
    %c0_11 = arith.constant 0 : index
    %36 = vector.load %arg3[%c1, %c0_11] : memref<3x256xf32, #tpu.memory_space<vmem>>, vector<1x256xf32>
    %37 = vector.broadcast %36 : vector<1x256xf32> to vector<32x256xf32>
    %38 = arith.mulf %37, %0 : vector<32x256xf32>
    %c1_i32_12 = arith.constant 1 : i32
    %39 = tpu.dynamic_rotate %0 by %c1_i32_12 dim 0 : vector<32x256xf32>, i32 -> vector<32x256xf32>
    %cst = arith.constant 0.000000e+00 : f32
    %40 = vector.shape_cast %26 : vector<32x1xi1> to vector<32x1xi1>
    %41 = vector.broadcast %40 : vector<32x1xi1> to vector<32x256xi1>
    %42 = vector.broadcast %cst : f32 to vector<32x256xf32>
    %43 = arith.select %41, %39, %42 : vector<32x256xi1>, vector<32x256xf32>
    %c0_13 = arith.constant 0 : index
    %c0_14 = arith.constant 0 : index
    %44 = vector.load %arg3[%c0_13, %c0_14] : memref<3x256xf32, #tpu.memory_space<vmem>>, vector<1x256xf32>
    %45 = vector.broadcast %44 : vector<1x256xf32> to vector<32x256xf32>
    %46 = arith.mulf %45, %43 : vector<32x256xf32>
    %47 = arith.addf %38, %46 : vector<32x256xf32>
    %c31_i32 = arith.constant 31 : i32
    %48 = tpu.dynamic_rotate %0 by %c31_i32 dim 0 : vector<32x256xf32>, i32 -> vector<32x256xf32>
    %cst_15 = arith.constant 0.000000e+00 : f32
    %49 = vector.shape_cast %35 : vector<32x1xi1> to vector<32x1xi1>
    %50 = vector.broadcast %49 : vector<32x1xi1> to vector<32x256xi1>
    %51 = vector.broadcast %cst_15 : f32 to vector<32x256xf32>
    %52 = arith.select %50, %48, %51 : vector<32x256xi1>, vector<32x256xf32>
    %c2 = arith.constant 2 : index
    %c0_16 = arith.constant 0 : index
    %53 = vector.load %arg3[%c2, %c0_16] : memref<3x256xf32, #tpu.memory_space<vmem>>, vector<1x256xf32>
    %54 = vector.broadcast %53 : vector<1x256xf32> to vector<32x256xf32>
    %55 = arith.mulf %54, %52 : vector<32x256xf32>
    %56 = arith.addf %47, %55 : vector<32x256xf32>
    %c1_17 = arith.constant 1 : index
    %c0_18 = arith.constant 0 : index
    %57 = vector.load %arg4[%c1_17, %c0_18] : memref<3x256xf32, #tpu.memory_space<vmem>>, vector<1x256xf32>
    %58 = vector.broadcast %57 : vector<1x256xf32> to vector<32x256xf32>
    %59 = arith.mulf %58, %56 : vector<32x256xf32>
    %c1_i32_19 = arith.constant 1 : i32
    %60 = tpu.dynamic_rotate %56 by %c1_i32_19 dim 0 : vector<32x256xf32>, i32 -> vector<32x256xf32>
    %cst_20 = arith.constant 0.000000e+00 : f32
    %61 = vector.shape_cast %26 : vector<32x1xi1> to vector<32x1xi1>
    %62 = vector.broadcast %61 : vector<32x1xi1> to vector<32x256xi1>
    %63 = vector.broadcast %cst_20 : f32 to vector<32x256xf32>
    %64 = arith.select %62, %60, %63 : vector<32x256xi1>, vector<32x256xf32>
    %c0_21 = arith.constant 0 : index
    %c0_22 = arith.constant 0 : index
    %65 = vector.load %arg4[%c0_21, %c0_22] : memref<3x256xf32, #tpu.memory_space<vmem>>, vector<1x256xf32>
    %66 = vector.broadcast %65 : vector<1x256xf32> to vector<32x256xf32>
    %67 = arith.mulf %66, %64 : vector<32x256xf32>
    %68 = arith.addf %59, %67 : vector<32x256xf32>
    %c31_i32_23 = arith.constant 31 : i32
    %69 = tpu.dynamic_rotate %56 by %c31_i32_23 dim 0 : vector<32x256xf32>, i32 -> vector<32x256xf32>
    %cst_24 = arith.constant 0.000000e+00 : f32
    %70 = vector.shape_cast %35 : vector<32x1xi1> to vector<32x1xi1>
    %71 = vector.broadcast %70 : vector<32x1xi1> to vector<32x256xi1>
    %72 = vector.broadcast %cst_24 : f32 to vector<32x256xf32>
    %73 = arith.select %71, %69, %72 : vector<32x256xi1>, vector<32x256xf32>
    %c2_25 = arith.constant 2 : index
    %c0_26 = arith.constant 0 : index
    %74 = vector.load %arg4[%c2_25, %c0_26] : memref<3x256xf32, #tpu.memory_space<vmem>>, vector<1x256xf32>
    %75 = vector.broadcast %74 : vector<1x256xf32> to vector<32x256xf32>
    %76 = arith.mulf %75, %73 : vector<32x256xf32>
    %77 = arith.addf %68, %76 : vector<32x256xf32>
    %c0_27 = arith.constant 0 : index
    %c0_28 = arith.constant 0 : index
    %78 = vector.load %arg5[%c0_27, %c0_28] : memref<32x256xf32, #tpu.memory_space<vmem>>, vector<32x256xf32>
    tpu.vector_store %arg5[%c0_27, %c0_28], %77 {strides = array<i32>} : memref<32x256xf32, #tpu.memory_space<vmem>>, vector<32x256xf32>,
    return
  }
  func.func @transform_0(%arg0: i32, %arg1: i32) -> (i32, i32) {
    %c0_i32 = arith.constant 0 : i32
    return %arg1, %arg0 : i32, i32
  }
  func.func @transform_1(%arg0: i32, %arg1: i32) -> (i32, i32) {
    %c0_i32 = arith.constant 0 : i32
    %c0_i32_0 = arith.constant 0 : i32
    return %c0_i32, %arg0 : i32, i32
  }
  func.func @transform_2(%arg0: i32, %arg1: i32) -> (i32, i32) {
    %c0_i32 = arith.constant 0 : i32
    %c0_i32_0 = arith.constant 0 : i32
    return %c0_i32, %arg0 : i32, i32
  }
  func.func @transform_3(%arg0: i32, %arg1: i32) -> (i32, i32) {
    %c0_i32 = arith.constant 0 : i32
    return %arg1, %arg0 : i32, i32
  }
}

</mosaic_0001>

<llo_original>
// kernel: tpu_custom_call.1
$region0: #{tpu_custom_call.1}
  #allocation0 [shape = 'u32[]', space=smem, size = 0x4, offset = 0x4, fixed_abs, tag = 'smem constant byte address 0x4 - core index']
  #allocation1 [shape = 'u32[144,128]{1,0:T(1,128)}', space=vmem, size = 0x12000, scoped, tag = 'internal scratch']
  %s0 = inlined_call_operand.hbm [shape: f32[32,256], index: 0, kind: input, shape index: {}]
  %s1 = inlined_call_operand.hbm [shape: f32[3,256], index: 1, kind: input, shape index: {}]
  %s2 = inlined_call_operand.hbm [shape: f32[3,256], index: 2, kind: input, shape index: {}]
  %s3 = inlined_call_operand.hbm [shape: f32[32,256], index: 3, kind: output, shape index: {}]
  %s4 = sld [smem:[#allocation0]]
  $region34: #{tpu_custom_call.1} parent=0
    _
  %s6 = ssub.s32 1, %s4
  %s7 = scalar_select 0, %s6, %s4
  $region1: #{tpu_custom_call.1} parent=0
    #allocation2 [shape = 'u8[32768]{0}', space=vmem, size = 0x8000, scoped, tag = 'input window, operand 0, single buffered']
    #allocation3 [shape = 's32[1]{0}', space=sflag, size = 0x4, scoped, tag = 'scoped memory for tpu_custom_call.1']
    #allocation4 [shape = 's32[1]{0}', space=sflag, size = 0x4, scoped, tag = 'scoped memory for tpu_custom_call.1']
    #allocation5 [shape = 'u8[4096]{0}', space=vmem, size = 0x1000, scoped, tag = 'input window, operand 1, single buffered']
    #allocation6 [shape = 's32[1]{0}', space=sflag, size = 0x4, scoped, tag = 'scoped memory for tpu_custom_call.1']
    #allocation7 [shape = 'u8[4096]{0}', space=vmem, size = 0x1000, scoped, tag = 'input window, operand 2, single buffered']
    #allocation8 [shape = 'u8[32768]{0}', space=vmem, size = 0x8000, scoped, tag = 'output window, operand 0, single buffered']
    %8 = vsyncpa [#allocation3], 0
    %9 = vsyncpa [#allocation6], 0
    %10 = vsyncpa [#allocation4], 0
    // Predicated region
    $region2: #{tpu_custom_call.1} parent=1 // pred_check
      _
    $region3: #{tpu_custom_call.1} parent=1 // pred_check_branch
      %12 = sbr.rel (0) target = $region5
    $region4: #{tpu_custom_call.1} parent=1 // pred_region
      %s14 = ssub.s32 1024, 1024
      %15 = vsyncadd [#allocation3], %s14
      %s16 = sshll.u32 [#allocation2], 4
      %s17 = int_to_ptr.vmem [resolvable:$true] %s16
      %22 = dma.hbm_to_vmem [thread:$0]  %s0, 1024, %s17, [#allocation3], 256, 256, 16
    $region5: #{tpu_custom_call.1} parent=1 // pred_fallthru
      _
    // Predicated region
    $region6: #{tpu_custom_call.1} parent=1 // pred_check
      _
    $region7: #{tpu_custom_call.1} parent=1 // pred_check_branch
      %24 = sbr.rel (0) target = $region9
    $region8: #{tpu_custom_call.1} parent=1 // pred_region
      %s26 = ssub.s32 128, 128
      %27 = vsyncadd [#allocation6], %s26
      %s29 = sshll.u32 [#allocation5], 4
      %s30 = int_to_ptr.vmem [resolvable:$true] %s29
      %32 = dma.hbm_to_vmem [thread:$0]  %s1, 128, %s30, [#allocation6]
    $region9: #{tpu_custom_call.1} parent=1 // pred_fallthru
      _
    // Predicated region
    $region10: #{tpu_custom_call.1} parent=1 // pred_check
      _
    $region11: #{tpu_custom_call.1} parent=1 // pred_check_branch
      %34 = sbr.rel (0) target = $region13
    $region12: #{tpu_custom_call.1} parent=1 // pred_region
      %s36 = ssub.s32 128, 128
      %37 = vsyncadd [#allocation6], %s36
      %s39 = sshll.u32 [#allocation7], 4
      %s40 = int_to_ptr.vmem [resolvable:$true] %s39
      %42 = dma.hbm_to_vmem [thread:$0]  %s2, 128, %s40, [#allocation6]
    $region13: #{tpu_custom_call.1} parent=1 // pred_fallthru
      _
    // Predicated region
    $region14: #{tpu_custom_call.1} parent=1 // pred_check
      _
    $region15: #{tpu_custom_call.1} parent=1 // pred_check_branch
      %44 = sbr.rel (0) target = $region17
    $region16: #{tpu_custom_call.1} parent=1 // pred_region
      %45 = dma.done [#allocation3], 1024
    $region17: #{tpu_custom_call.1} parent=1 // pred_fallthru
      _
    // Predicated region
    $region18: #{tpu_custom_call.1} parent=1 // pred_check
      _
    $region19: #{tpu_custom_call.1} parent=1 // pred_check_branch
      %47 = sbr.rel (0) target = $region21
    $region20: #{tpu_custom_call.1} parent=1 // pred_region
      %48 = dma.done [#allocation6], 128
    $region21: #{tpu_custom_call.1} parent=1 // pred_fallthru
      _
    // Predicated region
    $region22: #{tpu_custom_call.1} parent=1 // pred_check
      _
    $region23: #{tpu_custom_call.1} parent=1 // pred_check_branch
      %50 = sbr.rel (0) target = $region25
    $region24: #{tpu_custom_call.1} parent=1 // pred_region
      %51 = dma.done [#allocation6], 128
    $region25: #{tpu_custom_call.1} parent=1 // pred_fallthru
      _
    %v52 = vld [vmem:[#allocation2] sm:$0xff]
    %v53 = vld [vmem:[#allocation2 + $0x8] sm:$0xff]
    %v54 = vld [vmem:[#allocation2 + $0x10] sm:$0xff]
    %v55 = vld [vmem:[#allocation2 + $0x18] sm:$0xff]
    %v56 = vld [vmem:[#allocation2 + $0x20] sm:$0xff]
    %v57 = vld [vmem:[#allocation2 + $0x28] sm:$0xff]
    %v58 = vld [vmem:[#allocation2 + $0x30] sm:$0xff]
    %v59 = vld [vmem:[#allocation2 + $0x38] sm:$0xff]
    %v60 = vlaneseq
    %v61 = vshrl.u32 %v60, 7
    %v62 = vadd.s32 %v61, 8
    %v63 = vadd.s32 %v61, 16
    %v64 = vadd.s32 %v61, 24
    %vm65 = vcmp.lt.s32.totalorder %v61, 0
    %v66 = vsub.s32 0, %v61
    %v67 = vsel %vm65, %v66, %v61
    %v68 = vshrl.u32 %v67, 4
    %v69 = vand.u32 %v67, 15
    %v70 = vsub.s32 0, %v69
    %v71 = vsel %vm65, %v70, %v69
    %vm72 = vcmp.lt.s32.totalorder %v62, 0
    %v73 = vsub.s32 0, %v62
    %v74 = vsel %vm72, %v73, %v62
    %v75 = vshrl.u32 %v74, 4
    %v76 = vand.u32 %v74, 15
    %v77 = vsub.s32 0, %v76
    %v78 = vsel %vm72, %v77, %v76
    %vm79 = vcmp.lt.s32.totalorder %v63, 0
    %v80 = vsub.s32 0, %v63
    %v81 = vsel %vm79, %v80, %v63
    %v82 = vshrl.u32 %v81, 4
    %v83 = vand.u32 %v81, 15
    %v84 = vsub.s32 0, %v83
    %v85 = vsel %vm79, %v84, %v83
    %vm86 = vcmp.lt.s32.totalorder %v64, 0
    %v87 = vsub.s32 0, %v64
    %v88 = vsel %vm86, %v87, %v64
    %v89 = vshrl.u32 %v88, 4
    %v90 = vand.u32 %v88, 15
    %v91 = vsub.s32 0, %v90
    %v92 = vsel %vm86, %v91, %v90
    %vm93 = vcmp.ne.s32.totalorder %v71, 0
    %vm94 = vcmp.ne.s32.totalorder %v78, 0
    %vm95 = vcmp.ne.s32.totalorder %v85, 0
    %vm96 = vcmp.ne.s32.totalorder %v92, 0
    %vm97 = vcmp.lt.s32.totalorder %v71, 0
    %vm98 = vcmp.lt.s32.totalorder %v78, 0
    %vm99 = vcmp.lt.s32.totalorder %v85, 0
    %vm100 = vcmp.lt.s32.totalorder %v92, 0
    %vm101 = vmand %vm97, %vm93
    %vm102 = vmand %vm98, %vm94
    %vm103 = vmand %vm99, %vm95
    %vm104 = vmand %vm100, %vm96
    %v105 = vadd.s32 %v71, 16
    %v106 = vadd.s32 %v78, 16
    %v107 = vadd.s32 %v85, 16
    %v108 = vadd.s32 %v92, 16
    %v109 = vsel %vm101, %v105, %v71
    %v110 = vsel %vm102, %v106, %v78
    %v111 = vsel %vm103, %v107, %v85
    %v112 = vsel %vm104, %v108, %v92
    %v113 = vadd.s32 %v109, 4294967295
    %v114 = vadd.s32 %v110, 4294967295
    %v115 = vadd.s32 %v111, 4294967295
    %v116 = vadd.s32 %v112, 4294967295
    %vm117 = vcmp.ge.s32.totalorder %v113, 0
    %vm118 = vcmp.ge.s32.totalorder %v114, 0
    %vm119 = vcmp.ge.s32.totalorder %v115, 0
    %vm120 = vcmp.ge.s32.totalorder %v116, 0
    %vm121 = vcmp.lt.s32.totalorder %v113, 16
    %vm122 = vcmp.lt.s32.totalorder %v114, 16
    %vm123 = vcmp.lt.s32.totalorder %v115, 16
    %vm124 = vcmp.lt.s32.totalorder %v116, 16
    %vm125 = vmand %vm117, %vm121
    %vm126 = vmand %vm118, %vm122
    %vm127 = vmand %vm119, %vm123
    %vm128 = vmand %vm120, %vm124
    %v129 = vadd.s32 %v109, 1
    %v130 = vadd.s32 %v110, 1
    %v131 = vadd.s32 %v111, 1
    %v132 = vadd.s32 %v112, 1
    %vm133 = vcmp.ge.s32.totalorder %v129, 0
    %vm134 = vcmp.ge.s32.totalorder %v130, 0
    %vm135 = vcmp.ge.s32.totalorder %v131, 0
    %vm136 = vcmp.ge.s32.totalorder %v132, 0
    %vm137 = vcmp.lt.s32.totalorder %v129, 16
    %vm138 = vcmp.lt.s32.totalorder %v130, 16
    %vm139 = vcmp.lt.s32.totalorder %v131, 16
    %vm140 = vcmp.lt.s32.totalorder %v132, 16
    %vm141 = vmand %vm133, %vm137
    %vm142 = vmand %vm134, %vm138
    %vm143 = vmand %vm135, %vm139
    %vm144 = vmand %vm136, %vm140
    %s145 = scalar_lea.vmem [#allocation5], 1
    %v146 = vld [vmem:[%s145] ss:$4 sm:$0x3]
    %v148 = vlaneseq
    %v149 = vshrl.u32 %v148, 7
    %v150 = vsub.s32 0, %v149
    %v151 = vrot.slane %v146, %v150
    %v152 = vlaneseq
    %v153 = vshrl.u32 %v152, 7
    %v154 = vsub.s32 1, %v153
    %v155 = vrot.slane %v146, %v154
    %v158 = vmul.f32 %v151, %v52
    %v159 = vmul.f32 %v155, %v53
    %v160 = vmul.f32 %v151, %v54
    %v161 = vmul.f32 %v155, %v55
    %v162 = vmul.f32 %v151, %v56
    %v163 = vmul.f32 %v155, %v57
    %v164 = vmul.f32 %v151, %v58
    %v165 = vmul.f32 %v155, %v59
    %v166 = vrot.slane %v52, 7
    %v167 = vrot.slane %v53, 7
    %v168 = vrot.slane %v54, 7
    %v169 = vrot.slane %v55, 7
    %v170 = vrot.slane %v56, 7
    %v171 = vrot.slane %v57, 7
    %v172 = vrot.slane %v58, 7
    %v173 = vrot.slane %v59, 7
    %vm174 = vcmp.lt.s32.totalorder %v61, 1
    %v175 = vsel %vm174, %v170, %v172
    %v176 = vsel %vm174, %v171, %v173
    %v177 = vsel %vm174, %v168, %v170
    %v178 = vsel %vm174, %v169, %v171
    %v179 = vsel %vm174, %v166, %v168
    %v180 = vsel %vm174, %v167, %v169
    %v181 = vsel %vm174, %v172, %v166
    %v182 = vsel %vm174, %v173, %v167
    %v183 = vsel %vm125, 1, 0
    %v184 = vsel %vm126, 1, 0
    %v185 = vsel %vm127, 1, 0
    %v186 = vsel %vm128, 1, 0
    %vm187 = vcmp.eq.s32.totalorder %v183, 1
    %vm188 = vcmp.eq.s32.totalorder %v184, 1
    %vm189 = vcmp.eq.s32.totalorder %v185, 1
    %vm190 = vcmp.eq.s32.totalorder %v186, 1
    %v191 = vsel %vm187, %v181, 0.0
    %v192 = vsel %vm187, %v182, 0.0
    %v193 = vsel %vm188, %v179, 0.0
    %v194 = vsel %vm188, %v180, 0.0
    %v195 = vsel %vm189, %v177, 0.0
    %v196 = vsel %vm189, %v178, 0.0
    %v197 = vsel %vm190, %v175, 0.0
    %v198 = vsel %vm190, %v176, 0.0
    %v199 = vld [vmem:[#allocation5] ss:$4 sm:$0x3]
    %v201 = vlaneseq
    %v202 = vshrl.u32 %v201, 7
    %v203 = vsub.s32 0, %v202
    %v204 = vrot.slane %v199, %v203
    %v205 = vlaneseq
    %v206 = vshrl.u32 %v205, 7
    %v207 = vsub.s32 1, %v206
    %v208 = vrot.slane %v199, %v207
    %v211 = vmul.f32 %v204, %v191
    %v212 = vmul.f32 %v208, %v192
    %v213 = vmul.f32 %v204, %v193
    %v214 = vmul.f32 %v208, %v194
    %v215 = vmul.f32 %v204, %v195
    %v216 = vmul.f32 %v208, %v196
    %v217 = vmul.f32 %v204, %v197
    %v218 = vmul.f32 %v208, %v198
    %v219 = vadd.f32 %v158, %v211
    %v220 = vadd.f32 %v159, %v212
    %v221 = vadd.f32 %v160, %v213
    %v222 = vadd.f32 %v161, %v214
    %v223 = vadd.f32 %v162, %v215
    %v224 = vadd.f32 %v163, %v216
    %v225 = vadd.f32 %v164, %v217
    %v226 = vadd.f32 %v165, %v218
    %v227 = vrot.slane %v52, 1
    %v228 = vrot.slane %v53, 1
    %v229 = vrot.slane %v54, 1
    %v230 = vrot.slane %v55, 1
    %v231 = vrot.slane %v56, 1
    %v232 = vrot.slane %v57, 1
    %v233 = vrot.slane %v58, 1
    %v234 = vrot.slane %v59, 1
    %vm235 = vcmp.lt.s32.totalorder %v61, 7
    %v236 = vsel %vm235, %v231, %v233
    %v237 = vsel %vm235, %v232, %v234
    %v238 = vsel %vm235, %v229, %v231
    %v239 = vsel %vm235, %v230, %v232
    %v240 = vsel %vm235, %v227, %v229
    %v241 = vsel %vm235, %v228, %v230
    %v242 = vsel %vm235, %v233, %v227
    %v243 = vsel %vm235, %v234, %v228
    %v244 = vsel %vm141, 1, 0
    %v245 = vsel %vm142, 1, 0
    %v246 = vsel %vm143, 1, 0
    %v247 = vsel %vm144, 1, 0
    %vm248 = vcmp.eq.s32.totalorder %v244, 1
    %vm249 = vcmp.eq.s32.totalorder %v245, 1
    %vm250 = vcmp.eq.s32.totalorder %v246, 1
    %vm251 = vcmp.eq.s32.totalorder %v247, 1
    %v252 = vsel %vm248, %v240, 0.0
    %v253 = vsel %vm248, %v241, 0.0
    %v254 = vsel %vm249, %v238, 0.0
    %v255 = vsel %vm249, %v239, 0.0
    %v256 = vsel %vm250, %v236, 0.0
    %v257 = vsel %vm250, %v237, 0.0
    %v258 = vsel %vm251, %v242, 0.0
    %v259 = vsel %vm251, %v243, 0.0
    %s260 = scalar_lea.vmem [#allocation5], 2
    %v261 = vld [vmem:[%s260] ss:$4 sm:$0x3]
    %v263 = vlaneseq
    %v264 = vshrl.u32 %v263, 7
    %v265 = vsub.s32 0, %v264
    %v266 = vrot.slane %v261, %v265
    %v267 = vlaneseq
    %v268 = vshrl.u32 %v267, 7
    %v269 = vsub.s32 1, %v268
    %v270 = vrot.slane %v261, %v269
    %v273 = vmul.f32 %v266, %v252
    %v274 = vmul.f32 %v270, %v253
    %v275 = vmul.f32 %v266, %v254
    %v276 = vmul.f32 %v270, %v255
    %v277 = vmul.f32 %v266, %v256
    %v278 = vmul.f32 %v270, %v257
    %v279 = vmul.f32 %v266, %v258
    %v280 = vmul.f32 %v270, %v259
    %v281 = vadd.f32 %v219, %v273
    %v282 = vadd.f32 %v220, %v274
    %v283 = vadd.f32 %v221, %v275
    %v284 = vadd.f32 %v222, %v276
    %v285 = vadd.f32 %v223, %v277
    %v286 = vadd.f32 %v224, %v278
    %v287 = vadd.f32 %v225, %v279
    %v288 = vadd.f32 %v226, %v280
    %s289 = scalar_lea.vmem [#allocation7], 1
    %v290 = vld [vmem:[%s289] ss:$4 sm:$0x3]
    %v292 = vlaneseq
    %v293 = vshrl.u32 %v292, 7
    %v294 = vsub.s32 0, %v293
    %v295 = vrot.slane %v290, %v294
    %v296 = vlaneseq
    %v297 = vshrl.u32 %v296, 7
    %v298 = vsub.s32 1, %v297
    %v299 = vrot.slane %v290, %v298
    %v302 = vmul.f32 %v295, %v281
    %v303 = vmul.f32 %v299, %v282
    %v304 = vmul.f32 %v295, %v283
    %v305 = vmul.f32 %v299, %v284
    %v306 = vmul.f32 %v295, %v285
    %v307 = vmul.f32 %v299, %v286
    %v308 = vmul.f32 %v295, %v287
    %v309 = vmul.f32 %v299, %v288
    %v310 = vrot.slane %v281, 7
    %v311 = vrot.slane %v282, 7
    %v312 = vrot.slane %v283, 7
    %v313 = vrot.slane %v284, 7
    %v314 = vrot.slane %v285, 7
    %v315 = vrot.slane %v286, 7
    %v316 = vrot.slane %v287, 7
    %v317 = vrot.slane %v288, 7
    %v318 = vsel %vm174, %v314, %v316
    %v319 = vsel %vm174, %v315, %v317
    %v320 = vsel %vm174, %v312, %v314
    %v321 = vsel %vm174, %v313, %v315
    %v322 = vsel %vm174, %v310, %v312
    %v323 = vsel %vm174, %v311, %v313
    %v324 = vsel %vm174, %v316, %v310
    %v325 = vsel %vm174, %v317, %v311
    %v326 = vsel %vm187, %v324, 0.0
    %v327 = vsel %vm187, %v325, 0.0
    %v328 = vsel %vm188, %v322, 0.0
    %v329 = vsel %vm188, %v323, 0.0
    %v330 = vsel %vm189, %v320, 0.0
    %v331 = vsel %vm189, %v321, 0.0
    %v332 = vsel %vm190, %v318, 0.0
    %v333 = vsel %vm190, %v319, 0.0
    %v334 = vld [vmem:[#allocation7] ss:$4 sm:$0x3]
    %v336 = vlaneseq
    %v337 = vshrl.u32 %v336, 7
    %v338 = vsub.s32 0, %v337
    %v339 = vrot.slane %v334, %v338
    %v340 = vlaneseq
    %v341 = vshrl.u32 %v340, 7
    %v342 = vsub.s32 1, %v341
    %v343 = vrot.slane %v334, %v342
    %v346 = vmul.f32 %v339, %v326
    %v347 = vmul.f32 %v343, %v327
    %v348 = vmul.f32 %v339, %v328
    %v349 = vmul.f32 %v343, %v329
    %v350 = vmul.f32 %v339, %v330
    %v351 = vmul.f32 %v343, %v331
    %v352 = vmul.f32 %v339, %v332
    %v353 = vmul.f32 %v343, %v333
    %v354 = vadd.f32 %v302, %v346
    %v355 = vadd.f32 %v303, %v347
    %v356 = vadd.f32 %v304, %v348
    %v357 = vadd.f32 %v305, %v349
    %v358 = vadd.f32 %v306, %v350
    %v359 = vadd.f32 %v307, %v351
    %v360 = vadd.f32 %v308, %v352
    %v361 = vadd.f32 %v309, %v353
    %v362 = vrot.slane %v281, 1
    %v363 = vrot.slane %v282, 1
    %v364 = vrot.slane %v283, 1
    %v365 = vrot.slane %v284, 1
    %v366 = vrot.slane %v285, 1
    %v367 = vrot.slane %v286, 1
    %v368 = vrot.slane %v287, 1
    %v369 = vrot.slane %v288, 1
    %v370 = vsel %vm235, %v366, %v368
    %v371 = vsel %vm235, %v367, %v369
    %v372 = vsel %vm235, %v364, %v366
    %v373 = vsel %vm235, %v365, %v367
    %v374 = vsel %vm235, %v362, %v364
    %v375 = vsel %vm235, %v363, %v365
    %v376 = vsel %vm235, %v368, %v362
    %v377 = vsel %vm235, %v369, %v363
    %v378 = vsel %vm248, %v374, 0.0
    %v379 = vsel %vm248, %v375, 0.0
    %v380 = vsel %vm249, %v372, 0.0
    %v381 = vsel %vm249, %v373, 0.0
    %v382 = vsel %vm250, %v370, 0.0
    %v383 = vsel %vm250, %v371, 0.0
    %v384 = vsel %vm251, %v376, 0.0
    %v385 = vsel %vm251, %v377, 0.0
    %s386 = scalar_lea.vmem [#allocation7], 2
    %v387 = vld [vmem:[%s386] ss:$4 sm:$0x3]
    %v389 = vlaneseq
    %v390 = vshrl.u32 %v389, 7
    %v391 = vsub.s32 0, %v390
    %v392 = vrot.slane %v387, %v391
    %v393 = vlaneseq
    %v394 = vshrl.u32 %v393, 7
    %v395 = vsub.s32 1, %v394
    %v396 = vrot.slane %v387, %v395
    %v399 = vmul.f32 %v392, %v378
    %v400 = vmul.f32 %v396, %v379
    %v401 = vmul.f32 %v392, %v380
    %v402 = vmul.f32 %v396, %v381
    %v403 = vmul.f32 %v392, %v382
    %v404 = vmul.f32 %v396, %v383
    %v405 = vmul.f32 %v392, %v384
    %v406 = vmul.f32 %v396, %v385
    %v407 = vadd.f32 %v354, %v399
    %v408 = vadd.f32 %v355, %v400
    %v409 = vadd.f32 %v356, %v401
    %v410 = vadd.f32 %v357, %v402
    %v411 = vadd.f32 %v358, %v403
    %v412 = vadd.f32 %v359, %v404
    %v413 = vadd.f32 %v360, %v405
    %v414 = vadd.f32 %v361, %v406
    %415 = vst [vmem:[#allocation8] sm:$0xff] %v407
    %416 = vst [vmem:[#allocation8 + $0x8] sm:$0xff] %v408
    %417 = vst [vmem:[#allocation8 + $0x10] sm:$0xff] %v409
    %418 = vst [vmem:[#allocation8 + $0x18] sm:$0xff] %v410
    %419 = vst [vmem:[#allocation8 + $0x20] sm:$0xff] %v411
    %420 = vst [vmem:[#allocation8 + $0x28] sm:$0xff] %v412
    %421 = vst [vmem:[#allocation8 + $0x30] sm:$0xff] %v413
    %422 = vst [vmem:[#allocation8 + $0x38] sm:$0xff] %v414
    // Predicated region
    $region26: #{tpu_custom_call.1} parent=1 // pred_check
      _
    $region27: #{tpu_custom_call.1} parent=1 // pred_check_branch
      %424 = sbr.rel (0) target = $region29
    $region28: #{tpu_custom_call.1} parent=1 // pred_region
      %s426 = ssub.s32 1024, 1024
      %427 = vsyncadd [#allocation4], %s426
      %s428 = sshll.u32 [#allocation8], 4
      %s429 = int_to_ptr.vmem [resolvable:$true] %s428
      %434 = dma.vmem_to_hbm [thread:$0]  %s429, 1024, %s3, [#allocation4], 256, 256, 16
    $region29: #{tpu_custom_call.1} parent=1 // pred_fallthru
      _
    // Predicated region
    $region30: #{tpu_custom_call.1} parent=1 // pred_check
      _
    $region31: #{tpu_custom_call.1} parent=1 // pred_check_branch
      %436 = sbr.rel (0) target = $region33
    $region32: #{tpu_custom_call.1} parent=1 // pred_region
      %437 = dma.done [#allocation4], 1024
    $region33: #{tpu_custom_call.1} parent=1 // pred_fallthru
      _
    %438 = vsyncpa [#allocation3], 1
    %439 = vsyncpa [#allocation6], 1
    %440 = vsyncpa [#allocation4], 1

</llo_original>
